<compile_context>
chip_gen: v7x
topology: tpu7x:2x2x1
jax: 0.10.0
libtpu: 0.0.40
codegen_flags: <defaults>
</compile_context>

<pallas_src>
import math
import numpy as np
import jax
import jax.numpy as jnp
from jax.experimental import pallas as pl
from jax.experimental.pallas import tpu as pltpu


# ---------------------------------------------------------------------------
# Fixed (non-trainable) structural matrices from the reference module
# ---------------------------------------------------------------------------
def get_pooling_matrix(L):
    # block-diag of L copies of the 1x2 block [1, 1]  ->  [L, 2L]
    p = np.zeros((L, 2 * L), dtype=np.float32)
    idx = np.arange(L)
    p[idx, 2 * idx] = 1.0
    p[idx, 2 * idx + 1] = 1.0
    return p


def get_block_diagonal_matrix_b(L):
    # block-diag of floor(L/2) copies of [[0,1],[-1,0]] (+ a zero if L odd) -> [L, L]
    b = np.zeros((L, L), dtype=np.float32)
    for i in range(L // 2):
        b[2 * i, 2 * i + 1] = 1.0
        b[2 * i + 1, 2 * i] = -1.0
    return b


def get_reordering_matrix(L):
    if L == 1:
        return np.array([[1.0]], dtype=np.float32)
    h = L // 2
    r1 = np.zeros((2 * h, h), dtype=np.float32)
    r2 = np.zeros((2 * h, h), dtype=np.float32)
    for i in range(h):
        r1[2 * i, i] = 1.0      # blocks [[1],[0]]
        r2[2 * i + 1, i] = -1.0  # blocks [[0],[-1]]
    if L % 2 != 0:
        r = np.concatenate([r1, np.zeros((L - 1, 1), np.float32), r2], axis=1)
        last = np.zeros((1, L), np.float32)
        last[0, h] = 1.0
        r = np.concatenate([r, last], axis=0)
    else:
        r = np.concatenate([r1, r2], axis=1)
    return r.astype(np.float32)


# ---------------------------------------------------------------------------
# Single fused Pallas kernel: both RAE steps of the forward pass
# ---------------------------------------------------------------------------
def _pgp_fused_kernel(cx_ref, cy_ref, u1_ref, u2_ref, pw1_ref, w2e3_ref,
                      put_ref, bias_ref, out_ref):
    F2 = u1_ref.shape[1]        # 2F
    F = pw1_ref.shape[1]        # F
    P = put_ref.shape[1]        # P

    xb1 = bias_ref[0:1, :F2]    # [1, 2F]  = [x_bias | x_bias]
    yb2 = bias_ref[1:2, :F2]    # [1, 2F]  = [y_bias | y_bias @ b.T]
    mb = bias_ref[2:3, :F]      # [1, F]
    bo = bias_ref[3:4, :P]      # [1, P]   = b_output.T

    u1 = u1_ref[...]
    put = put_ref[...]
    cx = cx_ref[...]
    cy = cy_ref[...]

    # ---- step 1: RAE(batch[0], batch[1]) -----------------------------------
    mx1 = jnp.dot(cx, u1, preferred_element_type=jnp.float32) + xb1              # [bm, 2F]
    my1 = jnp.dot(cy, u2_ref[...], preferred_element_type=jnp.float32) + yb2     # [bm, 2F]
    m = jax.nn.sigmoid(
        jnp.dot(mx1 * my1, pw1_ref[...], preferred_element_type=jnp.float32) + mb)  # [bm, F]
    rr = jnp.dot(m, w2e3_ref[...], preferred_element_type=jnp.float32)           # [bm, 2F]
    out1 = jax.nn.sigmoid(
        jnp.dot(rr * mx1, put, preferred_element_type=jnp.float32) + bo)         # [bm, P]

    # ---- step 2: RAE(previous prediction, None) ----------------------------
    # y is None -> no noise, m (and hence rr) are reused unchanged.
    mx2 = jnp.dot(out1, u1, preferred_element_type=jnp.float32) + xb1            # [bm, 2F]
    out_ref[...] = jax.nn.sigmoid(
        jnp.dot(rr * mx2, put, preferred_element_type=jnp.float32) + bo)         # [bm, P]


def pgp_forward_fused(cor_x, cor_y, params):
    """Whole two-step RAE chain in a single pallas_call, batch-tiled."""
    B, P = cor_x.shape

    # Batch tile: one block for small batches (rounded to 8 sublanes), 256 rows
    # for large ones.  Pad host-side so every block is (8,128)-legal.
    if B <= 256:
        bm = max(8, ((B + 7) // 8) * 8)
    else:
        bm = 256
    Bp = ((B + bm - 1) // bm) * bm
    if Bp != B:
        cor_x = jnp.pad(cor_x, ((0, Bp - B), (0, 0)))
        cor_y = jnp.pad(cor_y, ((0, Bp - B), (0, 0)))

    u1, u2 = params["u1"], params["u2"]
    pw1, w2e3 = params["pw1"], params["w2e3"]
    put, bias = params["put"], params["bias_pack"]

    def const_spec(a):
        # full-array block, fetched once (block index never changes)
        return pl.BlockSpec(a.shape, lambda i: (0, 0))

    batch_spec = pl.BlockSpec((bm, P), lambda i: (i, 0))

    out = pl.pallas_call(
        _pgp_fused_kernel,
        out_shape=jax.ShapeDtypeStruct((Bp, P), jnp.float32),
        grid_spec=pltpu.PrefetchScalarGridSpec(
            num_scalar_prefetch=0,
            grid=(Bp // bm,),
            in_specs=[batch_spec, batch_spec,
                      const_spec(u1), const_spec(u2), const_spec(pw1),
                      const_spec(w2e3), const_spec(put), const_spec(bias)],
            out_specs=batch_spec,
        ),
        compiler_params=pltpu.CompilerParams(
            dimension_semantics=("parallel",)),
    )(cor_x, cor_y, u1, u2, pw1, w2e3, put, bias)
    return out[:B]


# ---------------------------------------------------------------------------
# Parameter construction (deterministic, synthetic init) + constant folding
# ---------------------------------------------------------------------------
def _xavier_normal(key, shape):
    std = math.sqrt(2.0 / (shape[0] + shape[1]))
    return std * jax.random.normal(key, shape, jnp.float32)


def _orthogonal(key, shape):
    a = jax.random.normal(key, shape, jnp.float32)
    q, _ = jnp.linalg.qr(a)
    return q[:, : shape[1]].astype(jnp.float32)


def build_params(key, image_shape=(16, 16), hidden_size=32):
    H, W = image_shape
    P = H * W
    F = hidden_size          # NB_FACTORS == N_MAPPINGS == hidden_size
    ks = jax.random.split(key, 8)

    w1 = _xavier_normal(ks[0], (F, F))
    w2 = _xavier_normal(ks[1], (F, F))
    x_bias = _xavier_normal(ks[2], (1, F))
    y_bias = _xavier_normal(ks[3], (1, F))
    m_bias = _xavier_normal(ks[4], (1, F))
    b_output = _xavier_normal(ks[5], (P, 1))
    u = _orthogonal(ks[6], (P, F))

    p = jnp.asarray(get_pooling_matrix(F))                 # [F, 2F]
    b = jnp.asarray(get_block_diagonal_matrix_b(F))        # [F, F]
    r = jnp.asarray(get_reordering_matrix(F))              # [F, F]
    e3 = jnp.concatenate([r, b @ r], axis=0)               # [2F, F]

    # -------- host-side constant folds (no structured matmul on-chip) -------
    u1 = jnp.concatenate([u, u], axis=1)                   # [P, 2F]   (e1 path)
    u2 = jnp.concatenate([u, u @ b.T], axis=1)             # [P, 2F]   (e2 path)
    xb1 = jnp.concatenate([x_bias, x_bias], axis=1)        # [1, 2F]
    yb2 = jnp.concatenate([y_bias, y_bias @ b.T], axis=1)  # [1, 2F]
    pw1 = p.T @ w1                                          # [2F, F]
    w2e3 = w2 @ e3.T                                        # [F, 2F]
    put = p.T @ u.T                                         # [2F, P]

    # -------- pack the four small bias rows into one VMEM array -------------
    padw = max(P, 2 * F)
    bias_pack = jnp.zeros((4, padw), jnp.float32)
    bias_pack = bias_pack.at[0, : 2 * F].set(xb1[0])
    bias_pack = bias_pack.at[1, : 2 * F].set(yb2[0])
    bias_pack = bias_pack.at[2, :F].set(m_bias[0])
    bias_pack = bias_pack.at[3, :P].set(b_output[:, 0])

    return {
        "u1": u1, "u2": u2, "pw1": pw1, "w2e3": w2e3, "put": put,
        "bias_pack": bias_pack,
        "image_shape": (H, W),
    }


# ---------------------------------------------------------------------------
# Model forward (glue in plain JAX, entire RAE chain in one Pallas kernel)
# ---------------------------------------------------------------------------
def model_forward(params, batch, noise_key, n_input_images=2):
    H, W = params["image_shape"]
    P = H * W
    # mean over dim=2 (C), flatten spatial, move frame axis first
    frames = jnp.mean(batch, axis=2).reshape(-1, n_input_images, P)
    frames = jnp.transpose(frames, (1, 0, 2))                       # [n_in, B, P]
    x0, x1 = frames[0], frames[1]

    # training-style gaussian corruption (kept outside the kernel so the
    # jax.random stream is bit-reproducible)
    # TODO(synk): could use pltpu.stateful_normal in-kernel to drop two tiny
    # elementwise XLA ops, at the cost of a different RNG stream.
    k1, k2 = jax.random.split(noise_key)
    cor_x = x0 + 0.1 * jax.random.normal(k1, x0.shape, jnp.float32)
    cor_y = x1 + 0.1 * jax.random.normal(k2, x1.shape, jnp.float32)

    # i = 1 (RAE with y) and i = 2 (RAE with y=None) fused in one kernel.
    out2 = pgp_forward_fused(cor_x, cor_y, params)                  # [B, P]

    # output = last frame; permute(1,0).view(-1,H,W).unsqueeze(1) * ones(1,3,1,1)
    out = jnp.transpose(out2, (1, 0)).reshape(-1, H, W)
    out = out[:, None, :, :] * jnp.ones((1, 3, 1, 1), out.dtype)
    return out


# ---------------------------------------------------------------------------
if __name__ == "__main__":
    key = jax.random.PRNGKey(0)
    k_param, k_data, k_noise = jax.random.split(key, 3)

    B, n_in, C, H, W = 2, 2, 4, 16, 16
    hidden = 32

    params = build_params(k_param, image_shape=(H, W), hidden_size=hidden)
    batch = jax.random.uniform(k_data, (B, n_in, C, H, W), jnp.float32)

    out = model_forward(params, batch, k_noise, n_input_images=n_in)
    out = jax.block_until_ready(out)

    assert out.shape == (B, 3, H, W), out.shape
    assert bool(jnp.all(jnp.isfinite(out)))
    print("KERNEL_OK")
</pallas_src>

<mosaic_0001>
module attributes {stable_mosaic.version = 11 : i64} {
  func.func @_pgp_fused_kernel(%arg0: i32, %arg1: memref<8x256xf32, #tpu.memory_space<vmem>>, %arg2: memref<8x256xf32, #tpu.memory_space<vmem>>, %arg3: memref<256x64xf32, #tpu.memory_space<vmem>>, %arg4: memref<256x64xf32, #tpu.memory_space<vmem>>, %arg5: memref<64x32xf32, #tpu.memory_space<vmem>>, %arg6: memref<32x64xf32, #tpu.memory_space<vmem>>, %arg7: memref<64x256xf32, #tpu.memory_space<vmem>>, %arg8: memref<4x256xf32, #tpu.memory_space<vmem>>, %arg9: memref<8x256xf32, #tpu.memory_space<vmem>>) attributes {dimension_semantics = [#tpu.dimension_semantics<parallel>], iteration_bounds = array<i64: 1>, scalar_prefetch = 0 : i64, scratch_operands = 0 : i64, tpu.core_type = #tpu.core_type<tc>, window_params = [{transform_indices = @transform_0, window_bounds = array<i64: 8, 256>}, {transform_indices = @transform_1, window_bounds = array<i64: 8, 256>}, {pipeline_mode = #tpu.pipeline_mode<synchronous>, transform_indices = @transform_2, window_bounds = array<i64: 256, 64>}, {pipeline_mode = #tpu.pipeline_mode<synchronous>, transform_indices = @transform_3, window_bounds = array<i64: 256, 64>}, {pipeline_mode = #tpu.pipeline_mode<synchronous>, transform_indices = @transform_4, window_bounds = array<i64: 64, 32>}, {pipeline_mode = #tpu.pipeline_mode<synchronous>, transform_indices = @transform_5, window_bounds = array<i64: 32, 64>}, {pipeline_mode = #tpu.pipeline_mode<synchronous>, transform_indices = @transform_6, window_bounds = array<i64: 64, 256>}, {pipeline_mode = #tpu.pipeline_mode<synchronous>, transform_indices = @transform_7, window_bounds = array<i64: 4, 256>}, {transform_indices = @transform_8, window_bounds = array<i64: 8, 256>}]} {
    %c0 = arith.constant 0 : index
    %c0_0 = arith.constant 0 : index
    %0 = vector.load %arg8[%c0, %c0_0] : memref<4x256xf32, #tpu.memory_space<vmem>>, vector<1x64xf32>
    %c1 = arith.constant 1 : index
    %c0_1 = arith.constant 0 : index
    %1 = vector.load %arg8[%c1, %c0_1] : memref<4x256xf32, #tpu.memory_space<vmem>>, vector<1x64xf32>
    %c2 = arith.constant 2 : index
    %c0_2 = arith.constant 0 : index
    %2 = vector.load %arg8[%c2, %c0_2] : memref<4x256xf32, #tpu.memory_space<vmem>>, vector<1x32xf32>
    %c3 = arith.constant 3 : index
    %c0_3 = arith.constant 0 : index
    %3 = vector.load %arg8[%c3, %c0_3] : memref<4x256xf32, #tpu.memory_space<vmem>>, vector<1x256xf32>
    %c0_4 = arith.constant 0 : index
    %c0_5 = arith.constant 0 : index
    %4 = vector.load %arg3[%c0_4, %c0_5] : memref<256x64xf32, #tpu.memory_space<vmem>>, vector<256x64xf32>
    %c0_6 = arith.constant 0 : index
    %c0_7 = arith.constant 0 : index
    %5 = vector.load %arg7[%c0_6, %c0_7] : memref<64x256xf32, #tpu.memory_space<vmem>>, vector<64x256xf32>
    %c0_8 = arith.constant 0 : index
    %c0_9 = arith.constant 0 : index
    %6 = vector.load %arg1[%c0_8, %c0_9] : memref<8x256xf32, #tpu.memory_space<vmem>>, vector<8x256xf32>
    %c0_10 = arith.constant 0 : index
    %c0_11 = arith.constant 0 : index
    %7 = vector.load %arg2[%c0_10, %c0_11] : memref<8x256xf32, #tpu.memory_space<vmem>>, vector<8x256xf32>
    %cst = arith.constant dense<0.000000e+00> : vector<8x64xf32>
    %8 = tpu.matmul %6, %4, %cst {dimension_numbers = #tpu.dot_dimension_numbers<[1], [0], [0], [1], [0, 0, 1, 1], [], []>} : vector<8x256xf32>, vector<256x64xf32>, vector<8x64xf32> -> vector<8x64xf32>
    %9 = vector.broadcast %0 : vector<1x64xf32> to vector<8x64xf32>
    %10 = arith.addf %8, %9 : vector<8x64xf32>
    %c0_12 = arith.constant 0 : index
    %c0_13 = arith.constant 0 : index
    %11 = vector.load %arg4[%c0_12, %c0_13] : memref<256x64xf32, #tpu.memory_space<vmem>>, vector<256x64xf32>
    %cst_14 = arith.constant dense<0.000000e+00> : vector<8x64xf32>
    %12 = tpu.matmul %7, %11, %cst_14 {dimension_numbers = #tpu.dot_dimension_numbers<[1], [0], [0], [1], [0, 0, 1, 1], [], []>} : vector<8x256xf32>, vector<256x64xf32>, vector<8x64xf32> -> vector<8x64xf32>
    %13 = vector.broadcast %1 : vector<1x64xf32> to vector<8x64xf32>
    %14 = arith.addf %12, %13 : vector<8x64xf32>
    %15 = arith.mulf %10, %14 : vector<8x64xf32>
    %c0_15 = arith.constant 0 : index
    %c0_16 = arith.constant 0 : index
    %16 = vector.load %arg5[%c0_15, %c0_16] : memref<64x32xf32, #tpu.memory_space<vmem>>, vector<64x32xf32>
    %cst_17 = arith.constant dense<0.000000e+00> : vector<8x32xf32>
    %17 = tpu.matmul %15, %16, %cst_17 {dimension_numbers = #tpu.dot_dimension_numbers<[1], [0], [0], [1], [0, 0, 1, 1], [], []>} : vector<8x64xf32>, vector<64x32xf32>, vector<8x32xf32> -> vector<8x32xf32>
    %18 = vector.broadcast %2 : vector<1x32xf32> to vector<8x32xf32>
    %19 = arith.addf %17, %18 : vector<8x32xf32>
    %20 = arith.negf %19 : vector<8x32xf32>
    %21 = math.exp %20 : vector<8x32xf32>
    %cst_18 = arith.constant 1.000000e+00 : f32
    %22 = vector.broadcast %cst_18 : f32 to vector<8x32xf32>
    %23 = arith.addf %22, %21 : vector<8x32xf32>
    %24 = arith.divf %22, %23 : vector<8x32xf32>
    %c0_19 = arith.constant 0 : index
    %c0_20 = arith.constant 0 : index
    %25 = vector.load %arg6[%c0_19, %c0_20] : memref<32x64xf32, #tpu.memory_space<vmem>>, vector<32x64xf32>
    %cst_21 = arith.constant dense<0.000000e+00> : vector<8x64xf32>
    %26 = tpu.matmul %24, %25, %cst_21 {dimension_numbers = #tpu.dot_dimension_numbers<[1], [0], [0], [1], [0, 0, 1, 1], [], []>} : vector<8x32xf32>, vector<32x64xf32>, vector<8x64xf32> -> vector<8x64xf32>
    %27 = arith.mulf %26, %10 : vector<8x64xf32>
    %cst_22 = arith.constant dense<0.000000e+00> : vector<8x256xf32>
    %28 = tpu.matmul %27, %5, %cst_22 {dimension_numbers = #tpu.dot_dimension_numbers<[1], [0], [0], [1], [0, 0, 1, 1], [], []>} : vector<8x64xf32>, vector<64x256xf32>, vector<8x256xf32> -> vector<8x256xf32>
    %29 = vector.broadcast %3 : vector<1x256xf32> to vector<8x256xf32>
    %30 = arith.addf %28, %29 : vector<8x256xf32>
    %31 = arith.negf %30 : vector<8x256xf32>
    %32 = math.exp %31 : vector<8x256xf32>
    %cst_23 = arith.constant 1.000000e+00 : f32
    %33 = vector.broadcast %cst_23 : f32 to vector<8x256xf32>
    %34 = arith.addf %33, %32 : vector<8x256xf32>
    %35 = arith.divf %33, %34 : vector<8x256xf32>
    %cst_24 = arith.constant dense<0.000000e+00> : vector<8x64xf32>
    %36 = tpu.matmul %35, %4, %cst_24 {dimension_numbers = #tpu.dot_dimension_numbers<[1], [0], [0], [1], [0, 0, 1, 1], [], []>} : vector<8x256xf32>, vector<256x64xf32>, vector<8x64xf32> -> vector<8x64xf32>
    %37 = vector.broadcast %0 : vector<1x64xf32> to vector<8x64xf32>
    %38 = arith.addf %36, %37 : vector<8x64xf32>
    %39 = arith.mulf %26, %38 : vector<8x64xf32>
    %cst_25 = arith.constant dense<0.000000e+00> : vector<8x256xf32>
    %40 = tpu.matmul %39, %5, %cst_25 {dimension_numbers = #tpu.dot_dimension_numbers<[1], [0], [0], [1], [0, 0, 1, 1], [], []>} : vector<8x64xf32>, vector<64x256xf32>, vector<8x256xf32> -> vector<8x256xf32>
    %41 = vector.broadcast %3 : vector<1x256xf32> to vector<8x256xf32>
    %42 = arith.addf %40, %41 : vector<8x256xf32>
    %43 = arith.negf %42 : vector<8x256xf32>
    %44 = math.exp %43 : vector<8x256xf32>
    %cst_26 = arith.constant 1.000000e+00 : f32
    %45 = vector.broadcast %cst_26 : f32 to vector<8x256xf32>
    %46 = arith.addf %45, %44 : vector<8x256xf32>
    %47 = arith.divf %45, %46 : vector<8x256xf32>
    %c0_27 = arith.constant 0 : index
    %c0_28 = arith.constant 0 : index
    %48 = vector.load %arg9[%c0_27, %c0_28] : memref<8x256xf32, #tpu.memory_space<vmem>>, vector<8x256xf32>
    tpu.vector_store %arg9[%c0_27, %c0_28], %47 {strides = array<i32>} : memref<8x256xf32, #tpu.memory_space<vmem>>, vector<8x256xf32>,
    return
  }
  func.func @transform_0(%arg0: i32) -> (i32, i32) {
    %c0_i32 = arith.constant 0 : i32
    %c0_i32_0 = arith.constant 0 : i32
    return %arg0, %c0_i32 : i32, i32
  }
  func.func @transform_1(%arg0: i32) -> (i32, i32) {
    %c0_i32 = arith.constant 0 : i32
    %c0_i32_0 = arith.constant 0 : i32
    return %arg0, %c0_i32 : i32, i32
  }
  func.func @transform_2(%arg0: i32) -> (i32, i32) {
    %c0_i32 = arith.constant 0 : i32
    %c0_i32_0 = arith.constant 0 : i32
    %c0_i32_1 = arith.constant 0 : i32
    return %c0_i32, %c0_i32_0 : i32, i32
  }
  func.func @transform_3(%arg0: i32) -> (i32, i32) {
    %c0_i32 = arith.constant 0 : i32
    %c0_i32_0 = arith.constant 0 : i32
    %c0_i32_1 = arith.constant 0 : i32
    return %c0_i32, %c0_i32_0 : i32, i32
  }
  func.func @transform_4(%arg0: i32) -> (i32, i32) {
    %c0_i32 = arith.constant 0 : i32
    %c0_i32_0 = arith.constant 0 : i32
    %c0_i32_1 = arith.constant 0 : i32
    return %c0_i32, %c0_i32_0 : i32, i32
  }
  func.func @transform_5(%arg0: i32) -> (i32, i32) {
    %c0_i32 = arith.constant 0 : i32
    %c0_i32_0 = arith.constant 0 : i32
    %c0_i32_1 = arith.constant 0 : i32
    return %c0_i32, %c0_i32_0 : i32, i32
  }
  func.func @transform_6(%arg0: i32) -> (i32, i32) {
    %c0_i32 = arith.constant 0 : i32
    %c0_i32_0 = arith.constant 0 : i32
    %c0_i32_1 = arith.constant 0 : i32
    return %c0_i32, %c0_i32_0 : i32, i32
  }
  func.func @transform_7(%arg0: i32) -> (i32, i32) {
    %c0_i32 = arith.constant 0 : i32
    %c0_i32_0 = arith.constant 0 : i32
    %c0_i32_1 = arith.constant 0 : i32
    return %c0_i32, %c0_i32_0 : i32, i32
  }
  func.func @transform_8(%arg0: i32) -> (i32, i32) {
    %c0_i32 = arith.constant 0 : i32
    %c0_i32_0 = arith.constant 0 : i32
    return %arg0, %c0_i32 : i32, i32
  }
}

</mosaic_0001>

<llo_original>
// kernel: tpu_custom_call.1
$region0: #{tpu_custom_call.1}
  #allocation0 [shape = 'u32[]', space=smem, size = 0x4, offset = 0x4, fixed_abs, tag = 'smem constant byte address 0x4 - core index']
  #allocation1 [shape = 'u32[144,128]{1,0:T(1,128)}', space=vmem, size = 0x12000, scoped, tag = 'internal scratch']
  %s0 = inlined_call_operand.vmem [shape: f32[8,256], index: 0, kind: input, shape index: {}]
  %s1 = inlined_call_operand.vmem [shape: f32[8,256], index: 1, kind: input, shape index: {}]
  %s2 = inlined_call_operand.vmem [shape: f32[256,64], index: 2, kind: input, shape index: {}]
  %s3 = inlined_call_operand.vmem [shape: f32[256,64], index: 3, kind: input, shape index: {}]
  %s4 = inlined_call_operand.vmem [shape: f32[64,32], index: 4, kind: input, shape index: {}]
  %s5 = inlined_call_operand.vmem [shape: f32[32,64], index: 5, kind: input, shape index: {}]
  %s6 = inlined_call_operand.vmem [shape: f32[64,256], index: 6, kind: input, shape index: {}]
  %s7 = inlined_call_operand.vmem [shape: f32[4,256], index: 7, kind: input, shape index: {}]
  %s8 = inlined_call_operand.hbm [shape: f32[8,256], index: 8, kind: output, shape index: {}]
  %s9 = sld [smem:[#allocation0]]
  $region42: #{tpu_custom_call.1} parent=0
    _
  %s11 = ssub.s32 1, %s9
  %s12 = scalar_select 0, %s11, %s9
  $region1: #{tpu_custom_call.1} parent=0
    #allocation2 [shape = 'u8[8192]{0}', space=vmem, size = 0x2000, scoped, tag = 'output window, operand 0, single buffered']
    #allocation3 [shape = 's32[1]{0}', space=sflag, size = 0x4, scoped, tag = 'scoped memory for tpu_custom_call.1']
    %13 = vsyncpa [#allocation3], 0
    // Predicated region
    $region2: #{tpu_custom_call.1} parent=1 // pred_check
      _
    $region3: #{tpu_custom_call.1} parent=1 // pred_check_branch
      %15 = sbr.rel (0) target = $region5
    $region4: #{tpu_custom_call.1} parent=1 // pred_region
      _
    $region5: #{tpu_custom_call.1} parent=1 // pred_fallthru
      _
    // Predicated region
    $region6: #{tpu_custom_call.1} parent=1 // pred_check
      _
    $region7: #{tpu_custom_call.1} parent=1 // pred_check_branch
      %17 = sbr.rel (0) target = $region9
    $region8: #{tpu_custom_call.1} parent=1 // pred_region
      _
    $region9: #{tpu_custom_call.1} parent=1 // pred_fallthru
      _
    // Predicated region
    $region10: #{tpu_custom_call.1} parent=1 // pred_check
      _
    $region11: #{tpu_custom_call.1} parent=1 // pred_check_branch
      %19 = sbr.rel (0) target = $region13
    $region12: #{tpu_custom_call.1} parent=1 // pred_region
      _
    $region13: #{tpu_custom_call.1} parent=1 // pred_fallthru
      _
    // Predicated region
    $region14: #{tpu_custom_call.1} parent=1 // pred_check
      _
    $region15: #{tpu_custom_call.1} parent=1 // pred_check_branch
      %21 = sbr.rel (0) target = $region17
    $region16: #{tpu_custom_call.1} parent=1 // pred_region
      _
    $region17: #{tpu_custom_call.1} parent=1 // pred_fallthru
      _
    // Predicated region
    $region18: #{tpu_custom_call.1} parent=1 // pred_check
      _
    $region19: #{tpu_custom_call.1} parent=1 // pred_check_branch
      %23 = sbr.rel (0) target = $region21
    $region20: #{tpu_custom_call.1} parent=1 // pred_region
      _
    $region21: #{tpu_custom_call.1} parent=1 // pred_fallthru
      _
    // Predicated region
    $region22: #{tpu_custom_call.1} parent=1 // pred_check
      _
    $region23: #{tpu_custom_call.1} parent=1 // pred_check_branch
      %25 = sbr.rel (0) target = $region25
    $region24: #{tpu_custom_call.1} parent=1 // pred_region
      _
    $region25: #{tpu_custom_call.1} parent=1 // pred_fallthru
      _
    // Predicated region
    $region26: #{tpu_custom_call.1} parent=1 // pred_check
      _
    $region27: #{tpu_custom_call.1} parent=1 // pred_check_branch
      %27 = sbr.rel (0) target = $region29
    $region28: #{tpu_custom_call.1} parent=1 // pred_region
      _
    $region29: #{tpu_custom_call.1} parent=1 // pred_fallthru
      _
    // Predicated region
    $region30: #{tpu_custom_call.1} parent=1 // pred_check
      _
    $region31: #{tpu_custom_call.1} parent=1 // pred_check_branch
      %29 = sbr.rel (0) target = $region33
    $region32: #{tpu_custom_call.1} parent=1 // pred_region
      _
    $region33: #{tpu_custom_call.1} parent=1 // pred_fallthru
      _
    %v30 = vld [vmem:[%s7] sm:$0x1]
    %v31 = vld [vmem:[%s7 + $0x1] sm:$0x1]
    %v32 = vld [vmem:[%s7 + $0x2] sm:$0x1]
    %s33 = scalar_lea.vmem %s7, 3
    %v34 = vld [vmem:[%s33] ss:$4 sm:$0x3]
    %v35 = vld [vmem:[%s2] sm:$0xff]
    %v36 = vld [vmem:[%s2 + $0x8] sm:$0xff]
    %v37 = vld [vmem:[%s2 + $0x10] sm:$0xff]
    %v38 = vld [vmem:[%s2 + $0x18] sm:$0xff]
    %v39 = vld [vmem:[%s2 + $0x20] sm:$0xff]
    %v40 = vld [vmem:[%s2 + $0x28] sm:$0xff]
    %v41 = vld [vmem:[%s2 + $0x30] sm:$0xff]
    %v42 = vld [vmem:[%s2 + $0x38] sm:$0xff]
    %v43 = vld [vmem:[%s2 + $0x40] sm:$0xff]
    %v44 = vld [vmem:[%s2 + $0x48] sm:$0xff]
    %v45 = vld [vmem:[%s2 + $0x50] sm:$0xff]
    %v46 = vld [vmem:[%s2 + $0x58] sm:$0xff]
    %v47 = vld [vmem:[%s2 + $0x60] sm:$0xff]
    %v48 = vld [vmem:[%s2 + $0x68] sm:$0xff]
    %v49 = vld [vmem:[%s2 + $0x70] sm:$0xff]
    %v50 = vld [vmem:[%s2 + $0x78] sm:$0xff]
    %v51 = vld [vmem:[%s2 + $0x80] sm:$0xff]
    %v52 = vld [vmem:[%s2 + $0x88] sm:$0xff]
    %v53 = vld [vmem:[%s2 + $0x90] sm:$0xff]
    %v54 = vld [vmem:[%s2 + $0x98] sm:$0xff]
    %v55 = vld [vmem:[%s2 + $0xa0] sm:$0xff]
    %v56 = vld [vmem:[%s2 + $0xa8] sm:$0xff]
    %v57 = vld [vmem:[%s2 + $0xb0] sm:$0xff]
    %v58 = vld [vmem:[%s2 + $0xb8] sm:$0xff]
    %v59 = vld [vmem:[%s2 + $0xc0] sm:$0xff]
    %v60 = vld [vmem:[%s2 + $0xc8] sm:$0xff]
    %v61 = vld [vmem:[%s2 + $0xd0] sm:$0xff]
    %v62 = vld [vmem:[%s2 + $0xd8] sm:$0xff]
    %v63 = vld [vmem:[%s2 + $0xe0] sm:$0xff]
    %v64 = vld [vmem:[%s2 + $0xe8] sm:$0xff]
    %v65 = vld [vmem:[%s2 + $0xf0] sm:$0xff]
    %v66 = vld [vmem:[%s2 + $0xf8] sm:$0xff]
    %v67 = vld [vmem:[%s6] sm:$0xff]
    %v68 = vld [vmem:[%s6 + $0x8] sm:$0xff]
    %v69 = vld [vmem:[%s6 + $0x10] sm:$0xff]
    %v70 = vld [vmem:[%s6 + $0x18] sm:$0xff]
    %v71 = vld [vmem:[%s6 + $0x20] sm:$0xff]
    %v72 = vld [vmem:[%s6 + $0x28] sm:$0xff]
    %v73 = vld [vmem:[%s6 + $0x30] sm:$0xff]
    %v74 = vld [vmem:[%s6 + $0x38] sm:$0xff]
    %v75 = vld [vmem:[%s6 + $0x40] sm:$0xff]
    %v76 = vld [vmem:[%s6 + $0x48] sm:$0xff]
    %v77 = vld [vmem:[%s6 + $0x50] sm:$0xff]
    %v78 = vld [vmem:[%s6 + $0x58] sm:$0xff]
    %v79 = vld [vmem:[%s6 + $0x60] sm:$0xff]
    %v80 = vld [vmem:[%s6 + $0x68] sm:$0xff]
    %v81 = vld [vmem:[%s6 + $0x70] sm:$0xff]
    %v82 = vld [vmem:[%s6 + $0x78] sm:$0xff]
    %v83 = vld [vmem:[%s0] sm:$0xff]
    %v84 = vld [vmem:[%s0 + $0x8] sm:$0xff]
    %v85 = vld [vmem:[%s1] sm:$0xff]
    %v86 = vld [vmem:[%s1 + $0x8] sm:$0xff]
    %v87 = vlaneseq
    %v88 = vshrl.u32 %v87, 7
    %v89 = vsub.s32 0, %v88
    %v90 = vrot.slane %v30, %v89
    %91 = vmatprep.subr.mxu0 0.0
    %92 = vmatpush1.msra.mxu0 %v35
    %93 = vmatprep.subr.mxu0 0.0
    %94 = vmatpush1.msra.mxu0 %v36
    %95 = vmatprep.subr.mxu0 0.0
    %96 = vmatpush1.msra.mxu0 %v37
    %97 = vmatprep.subr.mxu0 0.0
    %98 = vmatpush1.msra.mxu0 %v38
    %99 = vmatprep.subr.mxu0 0.0
    %100 = vmatpush1.msra.mxu0 %v39
    %101 = vmatprep.subr.mxu0 0.0
    %102 = vmatpush1.msra.mxu0 %v40
    %103 = vmatprep.subr.mxu0 0.0
    %104 = vmatpush1.msra.mxu0 %v41
    %105 = vmatprep.subr.mxu0 0.0
    %106 = vmatpush1.msra.mxu0 %v42
    %107 = vmatprep.subr.mxu0 0.0
    %108 = vmatpush1.msra.mxu0 %v43
    %109 = vmatprep.subr.mxu0 0.0
    %110 = vmatpush1.msra.mxu0 %v44
    %111 = vmatprep.subr.mxu0 0.0
    %112 = vmatpush1.msra.mxu0 %v45
    %113 = vmatprep.subr.mxu0 0.0
    %114 = vmatpush1.msra.mxu0 %v46
    %115 = vmatprep.subr.mxu0 0.0
    %116 = vmatpush1.msra.mxu0 %v47
    %117 = vmatprep.subr.mxu0 0.0
    %118 = vmatpush1.msra.mxu0 %v48
    %119 = vmatprep.subr.mxu0 0.0
    %120 = vmatpush1.msra.mxu0 %v49
    %121 = vmatprep.subr.mxu0 0.0
    %122 = vmatpush1.msra.mxu0 %v50
    %123 = vmatprep.subr.mxu0 0.0
    %124 = vmatpush1.msra.mxu0 %v51
    %125 = vmatprep.subr.mxu0 0.0
    %126 = vmatpush1.msra.mxu0 %v52
    %127 = vmatprep.subr.mxu0 0.0
    %128 = vmatpush1.msra.mxu0 %v53
    %129 = vmatprep.subr.mxu0 0.0
    %130 = vmatpush1.msra.mxu0 %v54
    %131 = vmatprep.subr.mxu0 0.0
    %132 = vmatpush1.msra.mxu0 %v55
    %133 = vmatprep.subr.mxu0 0.0
    %134 = vmatpush1.msra.mxu0 %v56
    %135 = vmatprep.subr.mxu0 0.0
    %136 = vmatpush1.msra.mxu0 %v57
    %137 = vmatprep.subr.mxu0 0.0
    %138 = vmatpush1.msra.mxu0 %v58
    %139 = vmatprep.subr.mxu0 0.0
    %140 = vmatpush1.msra.mxu0 %v59
    %141 = vmatprep.subr.mxu0 0.0
    %142 = vmatpush1.msra.mxu0 %v60
    %143 = vmatprep.subr.mxu0 0.0
    %144 = vmatpush1.msra.mxu0 %v61
    %145 = vmatprep.subr.mxu0 0.0
    %146 = vmatpush1.msra.mxu0 %v62
    %147 = vmatprep.subr.mxu0 0.0
    %148 = vmatpush1.msra.mxu0 %v63
    %149 = vmatprep.subr.mxu0 0.0
    %150 = vmatpush1.msra.mxu0 %v64
    %151 = vmatprep.subr.mxu0 0.0
    %152 = vmatpush1.msra.mxu0 %v65
    %153 = vmatprep.subr.mxu0 0.0
    %154 = vmatpush1.msra.mxu0 %v66
    %155 = vmatprep.mubr.f32.mxu0 %v84
    %156 = vmatmul.mubr.f32.gmra.mrb[0].mxu0 %v83
    %v157 = vpop.f32.mrb[0].mxu0
    %v158 = vadd.f32 %v90, %v157
    %v159 = vpop.f32.mrb[0].mxu0
    %160 = vdwg.mxu0
    %v161 = vld [vmem:[%s3] sm:$0xff]
    %v162 = vld [vmem:[%s3 + $0x8] sm:$0xff]
    %v163 = vld [vmem:[%s3 + $0x10] sm:$0xff]
    %v164 = vld [vmem:[%s3 + $0x18] sm:$0xff]
    %v165 = vld [vmem:[%s3 + $0x20] sm:$0xff]
    %v166 = vld [vmem:[%s3 + $0x28] sm:$0xff]
    %v167 = vld [vmem:[%s3 + $0x30] sm:$0xff]
    %v168 = vld [vmem:[%s3 + $0x38] sm:$0xff]
    %v169 = vld [vmem:[%s3 + $0x40] sm:$0xff]
    %v170 = vld [vmem:[%s3 + $0x48] sm:$0xff]
    %v171 = vld [vmem:[%s3 + $0x50] sm:$0xff]
    %v172 = vld [vmem:[%s3 + $0x58] sm:$0xff]
    %v173 = vld [vmem:[%s3 + $0x60] sm:$0xff]
    %v174 = vld [vmem:[%s3 + $0x68] sm:$0xff]
    %v175 = vld [vmem:[%s3 + $0x70] sm:$0xff]
    %v176 = vld [vmem:[%s3 + $0x78] sm:$0xff]
    %v177 = vld [vmem:[%s3 + $0x80] sm:$0xff]
    %v178 = vld [vmem:[%s3 + $0x88] sm:$0xff]
    %v179 = vld [vmem:[%s3 + $0x90] sm:$0xff]
    %v180 = vld [vmem:[%s3 + $0x98] sm:$0xff]
    %v181 = vld [vmem:[%s3 + $0xa0] sm:$0xff]
    %v182 = vld [vmem:[%s3 + $0xa8] sm:$0xff]
    %v183 = vld [vmem:[%s3 + $0xb0] sm:$0xff]
    %v184 = vld [vmem:[%s3 + $0xb8] sm:$0xff]
    %v185 = vld [vmem:[%s3 + $0xc0] sm:$0xff]
    %v186 = vld [vmem:[%s3 + $0xc8] sm:$0xff]
    %v187 = vld [vmem:[%s3 + $0xd0] sm:$0xff]
    %v188 = vld [vmem:[%s3 + $0xd8] sm:$0xff]
    %v189 = vld [vmem:[%s3 + $0xe0] sm:$0xff]
    %v190 = vld [vmem:[%s3 + $0xe8] sm:$0xff]
    %v191 = vld [vmem:[%s3 + $0xf0] sm:$0xff]
    %v192 = vld [vmem:[%s3 + $0xf8] sm:$0xff]
    %v193 = vlaneseq
    %v194 = vshrl.u32 %v193, 7
    %v195 = vsub.s32 0, %v194
    %v196 = vrot.slane %v31, %v195
    %197 = vmatprep.subr.mxu0 0.0
    %198 = vmatpush1.msra.mxu0 %v161
    %199 = vmatprep.subr.mxu0 0.0
    %200 = vmatpush1.msra.mxu0 %v162
    %201 = vmatprep.subr.mxu0 0.0
    %202 = vmatpush1.msra.mxu0 %v163
    %203 = vmatprep.subr.mxu0 0.0
    %204 = vmatpush1.msra.mxu0 %v164
    %205 = vmatprep.subr.mxu0 0.0
    %206 = vmatpush1.msra.mxu0 %v165
    %207 = vmatprep.subr.mxu0 0.0
    %208 = vmatpush1.msra.mxu0 %v166
    %209 = vmatprep.subr.mxu0 0.0
    %210 = vmatpush1.msra.mxu0 %v167
    %211 = vmatprep.subr.mxu0 0.0
    %212 = vmatpush1.msra.mxu0 %v168
    %213 = vmatprep.subr.mxu0 0.0
    %214 = vmatpush1.msra.mxu0 %v169
    %215 = vmatprep.subr.mxu0 0.0
    %216 = vmatpush1.msra.mxu0 %v170
    %217 = vmatprep.subr.mxu0 0.0
    %218 = vmatpush1.msra.mxu0 %v171
    %219 = vmatprep.subr.mxu0 0.0
    %220 = vmatpush1.msra.mxu0 %v172
    %221 = vmatprep.subr.mxu0 0.0
    %222 = vmatpush1.msra.mxu0 %v173
    %223 = vmatprep.subr.mxu0 0.0
    %224 = vmatpush1.msra.mxu0 %v174
    %225 = vmatprep.subr.mxu0 0.0
    %226 = vmatpush1.msra.mxu0 %v175
    %227 = vmatprep.subr.mxu0 0.0
    %228 = vmatpush1.msra.mxu0 %v176
    %229 = vmatprep.subr.mxu0 0.0
    %230 = vmatpush1.msra.mxu0 %v177
    %231 = vmatprep.subr.mxu0 0.0
    %232 = vmatpush1.msra.mxu0 %v178
    %233 = vmatprep.subr.mxu0 0.0
    %234 = vmatpush1.msra.mxu0 %v179
    %235 = vmatprep.subr.mxu0 0.0
    %236 = vmatpush1.msra.mxu0 %v180
    %237 = vmatprep.subr.mxu0 0.0
    %238 = vmatpush1.msra.mxu0 %v181
    %239 = vmatprep.subr.mxu0 0.0
    %240 = vmatpush1.msra.mxu0 %v182
    %241 = vmatprep.subr.mxu0 0.0
    %242 = vmatpush1.msra.mxu0 %v183
    %243 = vmatprep.subr.mxu0 0.0
    %244 = vmatpush1.msra.mxu0 %v184
    %245 = vmatprep.subr.mxu0 0.0
    %246 = vmatpush1.msra.mxu0 %v185
    %247 = vmatprep.subr.mxu0 0.0
    %248 = vmatpush1.msra.mxu0 %v186
    %249 = vmatprep.subr.mxu0 0.0
    %250 = vmatpush1.msra.mxu0 %v187
    %251 = vmatprep.subr.mxu0 0.0
    %252 = vmatpush1.msra.mxu0 %v188
    %253 = vmatprep.subr.mxu0 0.0
    %254 = vmatpush1.msra.mxu0 %v189
    %255 = vmatprep.subr.mxu0 0.0
    %256 = vmatpush1.msra.mxu0 %v190
    %257 = vmatprep.subr.mxu0 0.0
    %258 = vmatpush1.msra.mxu0 %v191
    %259 = vmatprep.subr.mxu0 0.0
    %260 = vmatpush1.msra.mxu0 %v192
    %261 = vmatprep.mubr.f32.mxu0 %v86
    %262 = vmatmul.mubr.f32.gmra.mrb[0].mxu0 %v85
    %v263 = vpop.f32.mrb[0].mxu0
    %v264 = vadd.f32 %v196, %v263
    %v265 = vpop.f32.mrb[0].mxu0
    %266 = vdwg.mxu0
    %v267 = vmul.f32 %v158, %v264
    %v268 = vld [vmem:[%s4] sm:$0xff]
    %v269 = vld [vmem:[%s4 + $0x8] sm:$0xff]
    %v270 = vld [vmem:[%s4 + $0x10] sm:$0xff]
    %v271 = vld [vmem:[%s4 + $0x18] sm:$0xff]
    %v272 = vld [vmem:[%s4 + $0x20] sm:$0xff]
    %v273 = vld [vmem:[%s4 + $0x28] sm:$0xff]
    %v274 = vld [vmem:[%s4 + $0x30] sm:$0xff]
    %v275 = vld [vmem:[%s4 + $0x38] sm:$0xff]
    %v276 = vlaneseq
    %v277 = vshrl.u32 %v276, 7
    %v278 = vsub.s32 0, %v277
    %v279 = vrot.slane %v32, %v278
    %vm280 = vcmask 523264
    %v282 = vsel %vm280, %v267, 0
    %284 = vmatprep.subr.mxu0 0.0
    %285 = vmatpush1.msra.mxu0 %v268
    %286 = vmatprep.subr.mxu0 0.0
    %287 = vmatpush1.msra.mxu0 %v269
    %288 = vmatprep.subr.mxu0 0.0
    %289 = vmatpush1.msra.mxu0 %v270
    %290 = vmatprep.subr.mxu0 0.0
    %291 = vmatpush1.msra.mxu0 %v271
    %292 = vmatprep.subr.mxu0 0.0
    %293 = vmatpush1.msra.mxu0 %v272
    %294 = vmatprep.subr.mxu0 0.0
    %295 = vmatpush1.msra.mxu0 %v273
    %296 = vmatprep.subr.mxu0 0.0
    %297 = vmatpush1.msra.mxu0 %v274
    %298 = vmatprep.subr.mxu0 0.0
    %299 = vmatpush1.msra.mxu0 %v275
    %300 = vmatprep.subr.mxu0 0.0
    %301 = vmatpush1.msra.mxu0 0.0
    %302 = vmatprep.subr.mxu0 0.0
    %303 = vmatpush1.msra.mxu0 0.0
    %304 = vmatprep.subr.mxu0 0.0
    %305 = vmatpush1.msra.mxu0 0.0
    %306 = vmatprep.subr.mxu0 0.0
    %307 = vmatpush1.msra.mxu0 0.0
    %308 = vmatprep.subr.mxu0 0.0
    %309 = vmatpush1.msra.mxu0 0.0
    %310 = vmatprep.subr.mxu0 0.0
    %311 = vmatpush1.msra.mxu0 0.0
    %312 = vmatprep.subr.mxu0 0.0
    %313 = vmatpush1.msra.mxu0 0.0
    %314 = vmatprep.subr.mxu0 0.0
    %315 = vmatpush1.msra.mxu0 0.0
    %316 = vmatprep.subr.mxu0 0.0
    %317 = vmatpush1.msra.mxu0 0.0
    %318 = vmatprep.subr.mxu0 0.0
    %319 = vmatpush1.msra.mxu0 0.0
    %320 = vmatprep.subr.mxu0 0.0
    %321 = vmatpush1.msra.mxu0 0.0
    %322 = vmatprep.subr.mxu0 0.0
    %323 = vmatpush1.msra.mxu0 0.0
    %324 = vmatprep.subr.mxu0 0.0
    %325 = vmatpush1.msra.mxu0 0.0
    %326 = vmatprep.subr.mxu0 0.0
    %327 = vmatpush1.msra.mxu0 0.0
    %328 = vmatprep.subr.mxu0 0.0
    %329 = vmatpush1.msra.mxu0 0.0
    %330 = vmatprep.subr.mxu0 0.0
    %331 = vmatpush1.msra.mxu0 0.0
    %332 = vmatprep.subr.mxu0 0.0
    %333 = vmatpush1.msra.mxu0 0.0
    %334 = vmatprep.subr.mxu0 0.0
    %335 = vmatpush1.msra.mxu0 0.0
    %336 = vmatprep.subr.mxu0 0.0
    %337 = vmatpush1.msra.mxu0 0.0
    %338 = vmatprep.subr.mxu0 0.0
    %339 = vmatpush1.msra.mxu0 0.0
    %340 = vmatprep.subr.mxu0 0.0
    %341 = vmatpush1.msra.mxu0 0.0
    %342 = vmatprep.subr.mxu0 0.0
    %343 = vmatpush1.msra.mxu0 0.0
    %344 = vmatprep.subr.mxu0 0.0
    %345 = vmatpush1.msra.mxu0 0.0
    %346 = vmatprep.subr.mxu0 0.0
    %347 = vmatpush1.msra.mxu0 0.0
    %348 = vmatprep.mubr.f32.mxu0 0.0
    %349 = vmatmul.mubr.f32.gmra.mrb[0].mxu0 %v282
    %v350 = vpop.f32.mrb[0].mxu0
    %v351 = vadd.f32 %v279, %v350
    %v352 = vpop.f32.mrb[0].mxu0
    %353 = vdwg.mxu0
    %v354 = vxor.u32 %v351, 2147483648
    %v355 = vmul.f32 %v354, 1.442695
    %v356 = vpow.pop %v355
    %v357 = vadd.f32 %v356, 1.0
    %v358 = vrcp.pop %v357
    %v359 = vmul.f32 1.0, %v358
    %v360 = vld [vmem:[%s5] sm:$0xff]
    %v361 = vld [vmem:[%s5 + $0x8] sm:$0xff]
    %v362 = vld [vmem:[%s5 + $0x10] sm:$0xff]
    %v363 = vld [vmem:[%s5 + $0x18] sm:$0xff]
    %vm364 = vcmask 261120
    %v366 = vsel %vm364, %v359, 0
    %368 = vmatprep.subr.mxu0 0.0
    %369 = vmatpush1.msra.mxu0 %v360
    %370 = vmatprep.subr.mxu0 0.0
    %371 = vmatpush1.msra.mxu0 %v361
    %372 = vmatprep.subr.mxu0 0.0
    %373 = vmatpush1.msra.mxu0 %v362
    %374 = vmatprep.subr.mxu0 0.0
    %375 = vmatpush1.msra.mxu0 %v363
    %376 = vmatprep.subr.mxu0 0.0
    %377 = vmatpush1.msra.mxu0 0.0
    %378 = vmatprep.subr.mxu0 0.0
    %379 = vmatpush1.msra.mxu0 0.0
    %380 = vmatprep.subr.mxu0 0.0
    %381 = vmatpush1.msra.mxu0 0.0
    %382 = vmatprep.subr.mxu0 0.0
    %383 = vmatpush1.msra.mxu0 0.0
    %384 = vmatprep.subr.mxu0 0.0
    %385 = vmatpush1.msra.mxu0 0.0
    %386 = vmatprep.subr.mxu0 0.0
    %387 = vmatpush1.msra.mxu0 0.0
    %388 = vmatprep.subr.mxu0 0.0
    %389 = vmatpush1.msra.mxu0 0.0
    %390 = vmatprep.subr.mxu0 0.0
    %391 = vmatpush1.msra.mxu0 0.0
    %392 = vmatprep.subr.mxu0 0.0
    %393 = vmatpush1.msra.mxu0 0.0
    %394 = vmatprep.subr.mxu0 0.0
    %395 = vmatpush1.msra.mxu0 0.0
    %396 = vmatprep.subr.mxu0 0.0
    %397 = vmatpush1.msra.mxu0 0.0
    %398 = vmatprep.subr.mxu0 0.0
    %399 = vmatpush1.msra.mxu0 0.0
    %400 = vmatprep.subr.mxu0 0.0
    %401 = vmatpush1.msra.mxu0 0.0
    %402 = vmatprep.subr.mxu0 0.0
    %403 = vmatpush1.msra.mxu0 0.0
    %404 = vmatprep.subr.mxu0 0.0
    %405 = vmatpush1.msra.mxu0 0.0
    %406 = vmatprep.subr.mxu0 0.0
    %407 = vmatpush1.msra.mxu0 0.0
    %408 = vmatprep.subr.mxu0 0.0
    %409 = vmatpush1.msra.mxu0 0.0
    %410 = vmatprep.subr.mxu0 0.0
    %411 = vmatpush1.msra.mxu0 0.0
    %412 = vmatprep.subr.mxu0 0.0
    %413 = vmatpush1.msra.mxu0 0.0
    %414 = vmatprep.subr.mxu0 0.0
    %415 = vmatpush1.msra.mxu0 0.0
    %416 = vmatprep.subr.mxu0 0.0
    %417 = vmatpush1.msra.mxu0 0.0
    %418 = vmatprep.subr.mxu0 0.0
    %419 = vmatpush1.msra.mxu0 0.0
    %420 = vmatprep.subr.mxu0 0.0
    %421 = vmatpush1.msra.mxu0 0.0
    %422 = vmatprep.subr.mxu0 0.0
    %423 = vmatpush1.msra.mxu0 0.0
    %424 = vmatprep.subr.mxu0 0.0
    %425 = vmatpush1.msra.mxu0 0.0
    %426 = vmatprep.subr.mxu0 0.0
    %427 = vmatpush1.msra.mxu0 0.0
    %428 = vmatprep.subr.mxu0 0.0
    %429 = vmatpush1.msra.mxu0 0.0
    %430 = vmatprep.subr.mxu0 0.0
    %431 = vmatpush1.msra.mxu0 0.0
    %432 = vmatprep.mubr.f32.mxu0 0.0
    %433 = vmatmul.mubr.f32.gmra.mrb[0].mxu0 %v366
    %v434 = vpop.f32.mrb[0].mxu0
    %v435 = vadd.f32 0.0, %v434
    %v436 = vpop.f32.mrb[0].mxu0
    %437 = vdwg.mxu0
    %v438 = vmul.f32 %v435, %v158
    %v440 = vlaneseq
    %v441 = vshrl.u32 %v440, 7
    %v442 = vsub.s32 0, %v441
    %v443 = vrot.slane %v34, %v442
    %v444 = vlaneseq
    %v445 = vshrl.u32 %v444, 7
    %v446 = vsub.s32 1, %v445
    %v447 = vrot.slane %v34, %v446
    %v451 = vsel %vm280, %v438, 0
    %453 = vmatprep.subr.mxu0 %v68
    %454 = vmatpush1.msra.mxu0 %v67
    %455 = vmatprep.subr.mxu0 %v70
    %456 = vmatpush1.msra.mxu0 %v69
    %457 = vmatprep.subr.mxu0 %v72
    %458 = vmatpush1.msra.mxu0 %v71
    %459 = vmatprep.subr.mxu0 %v74
    %460 = vmatpush1.msra.mxu0 %v73
    %461 = vmatprep.subr.mxu0 %v76
    %462 = vmatpush1.msra.mxu0 %v75
    %463 = vmatprep.subr.mxu0 %v78
    %464 = vmatpush1.msra.mxu0 %v77
    %465 = vmatprep.subr.mxu0 %v80
    %466 = vmatpush1.msra.mxu0 %v79
    %467 = vmatprep.subr.mxu0 %v82
    %468 = vmatpush1.msra.mxu0 %v81
    %469 = vmatprep.subr.mxu0 0.0
    %470 = vmatpush1.msra.mxu0 0.0
    %471 = vmatprep.subr.mxu0 0.0
    %472 = vmatpush1.msra.mxu0 0.0
    %473 = vmatprep.subr.mxu0 0.0
    %474 = vmatpush1.msra.mxu0 0.0
    %475 = vmatprep.subr.mxu0 0.0
    %476 = vmatpush1.msra.mxu0 0.0
    %477 = vmatprep.subr.mxu0 0.0
    %478 = vmatpush1.msra.mxu0 0.0
    %479 = vmatprep.subr.mxu0 0.0
    %480 = vmatpush1.msra.mxu0 0.0
    %481 = vmatprep.subr.mxu0 0.0
    %482 = vmatpush1.msra.mxu0 0.0
    %483 = vmatprep.subr.mxu0 0.0
    %484 = vmatpush1.msra.mxu0 0.0
    %485 = vmatprep.subr.mxu0 0.0
    %486 = vmatpush1.msra.mxu0 0.0
    %487 = vmatprep.subr.mxu0 0.0
    %488 = vmatpush1.msra.mxu0 0.0
    %489 = vmatprep.subr.mxu0 0.0
    %490 = vmatpush1.msra.mxu0 0.0
    %491 = vmatprep.subr.mxu0 0.0
    %492 = vmatpush1.msra.mxu0 0.0
    %493 = vmatprep.subr.mxu0 0.0
    %494 = vmatpush1.msra.mxu0 0.0
    %495 = vmatprep.subr.mxu0 0.0
    %496 = vmatpush1.msra.mxu0 0.0
    %497 = vmatprep.subr.mxu0 0.0
    %498 = vmatpush1.msra.mxu0 0.0
    %499 = vmatprep.subr.mxu0 0.0
    %500 = vmatpush1.msra.mxu0 0.0
    %501 = vmatprep.subr.mxu0 0.0
    %502 = vmatpush1.msra.mxu0 0.0
    %503 = vmatprep.subr.mxu0 0.0
    %504 = vmatpush1.msra.mxu0 0.0
    %505 = vmatprep.subr.mxu0 0.0
    %506 = vmatpush1.msra.mxu0 0.0
    %507 = vmatprep.subr.mxu0 0.0
    %508 = vmatpush1.msra.mxu0 0.0
    %509 = vmatprep.subr.mxu0 0.0
    %510 = vmatpush1.msra.mxu0 0.0
    %511 = vmatprep.subr.mxu0 0.0
    %512 = vmatpush1.msra.mxu0 0.0
    %513 = vmatprep.subr.mxu0 0.0
    %514 = vmatpush1.msra.mxu0 0.0
    %515 = vmatprep.subr.mxu0 0.0
    %516 = vmatpush1.msra.mxu0 0.0
    %517 = vmatprep.mubr.f32.mxu0 0.0
    %518 = vmatmul.mubr.f32.gmra.mrb[0].mxu0 %v451
    %v519 = vpop.f32.mrb[0].mxu0
    %v520 = vadd.f32 %v443, %v519
    %v521 = vpop.f32.mrb[0].mxu0
    %v522 = vadd.f32 %v447, %v521
    %523 = vdwg.mxu0
    %v524 = vxor.u32 %v520, 2147483648
    %v525 = vxor.u32 %v522, 2147483648
    %v526 = vmul.f32 %v524, 1.442695
    %v527 = vpow.pop %v526
    %v528 = vmul.f32 %v525, 1.442695
    %v529 = vpow.pop %v528
    %v530 = vadd.f32 %v527, 1.0
    %v531 = vadd.f32 %v529, 1.0
    %v532 = vrcp.pop %v530
    %v533 = vmul.f32 1.0, %v532
    %v534 = vrcp.pop %v531
    %v535 = vmul.f32 1.0, %v534
    %536 = vmatprep.subr.mxu0 0.0
    %537 = vmatpush1.msra.mxu0 %v35
    %538 = vmatprep.subr.mxu0 0.0
    %539 = vmatpush1.msra.mxu0 %v36
    %540 = vmatprep.subr.mxu0 0.0
    %541 = vmatpush1.msra.mxu0 %v37
    %542 = vmatprep.subr.mxu0 0.0
    %543 = vmatpush1.msra.mxu0 %v38
    %544 = vmatprep.subr.mxu0 0.0
    %545 = vmatpush1.msra.mxu0 %v39
    %546 = vmatprep.subr.mxu0 0.0
    %547 = vmatpush1.msra.mxu0 %v40
    %548 = vmatprep.subr.mxu0 0.0
    %549 = vmatpush1.msra.mxu0 %v41
    %550 = vmatprep.subr.mxu0 0.0
    %551 = vmatpush1.msra.mxu0 %v42
    %552 = vmatprep.subr.mxu0 0.0
    %553 = vmatpush1.msra.mxu0 %v43
    %554 = vmatprep.subr.mxu0 0.0
    %555 = vmatpush1.msra.mxu0 %v44
    %556 = vmatprep.subr.mxu0 0.0
    %557 = vmatpush1.msra.mxu0 %v45
    %558 = vmatprep.subr.mxu0 0.0
    %559 = vmatpush1.msra.mxu0 %v46
    %560 = vmatprep.subr.mxu0 0.0
    %561 = vmatpush1.msra.mxu0 %v47
    %562 = vmatprep.subr.mxu0 0.0
    %563 = vmatpush1.msra.mxu0 %v48
    %564 = vmatprep.subr.mxu0 0.0
    %565 = vmatpush1.msra.mxu0 %v49
    %566 = vmatprep.subr.mxu0 0.0
    %567 = vmatpush1.msra.mxu0 %v50
    %568 = vmatprep.subr.mxu0 0.0
    %569 = vmatpush1.msra.mxu0 %v51
    %570 = vmatprep.subr.mxu0 0.0
    %571 = vmatpush1.msra.mxu0 %v52
    %572 = vmatprep.subr.mxu0 0.0
    %573 = vmatpush1.msra.mxu0 %v53
    %574 = vmatprep.subr.mxu0 0.0
    %575 = vmatpush1.msra.mxu0 %v54
    %576 = vmatprep.subr.mxu0 0.0
    %577 = vmatpush1.msra.mxu0 %v55
    %578 = vmatprep.subr.mxu0 0.0
    %579 = vmatpush1.msra.mxu0 %v56
    %580 = vmatprep.subr.mxu0 0.0
    %581 = vmatpush1.msra.mxu0 %v57
    %582 = vmatprep.subr.mxu0 0.0
    %583 = vmatpush1.msra.mxu0 %v58
    %584 = vmatprep.subr.mxu0 0.0
    %585 = vmatpush1.msra.mxu0 %v59
    %586 = vmatprep.subr.mxu0 0.0
    %587 = vmatpush1.msra.mxu0 %v60
    %588 = vmatprep.subr.mxu0 0.0
    %589 = vmatpush1.msra.mxu0 %v61
    %590 = vmatprep.subr.mxu0 0.0
    %591 = vmatpush1.msra.mxu0 %v62
    %592 = vmatprep.subr.mxu0 0.0
    %593 = vmatpush1.msra.mxu0 %v63
    %594 = vmatprep.subr.mxu0 0.0
    %595 = vmatpush1.msra.mxu0 %v64
    %596 = vmatprep.subr.mxu0 0.0
    %597 = vmatpush1.msra.mxu0 %v65
    %598 = vmatprep.subr.mxu0 0.0
    %599 = vmatpush1.msra.mxu0 %v66
    %600 = vmatprep.mubr.f32.mxu0 %v535
    %601 = vmatmul.mubr.f32.gmra.mrb[0].mxu0 %v533
    %v602 = vpop.f32.mrb[0].mxu0
    %v603 = vadd.f32 %v90, %v602
    %v604 = vpop.f32.mrb[0].mxu0
    %605 = vdwg.mxu0
    %v606 = vmul.f32 %v435, %v603
    %v608 = vsel %vm280, %v606, 0
    %610 = vmatprep.subr.mxu0 %v68
    %611 = vmatpush1.msra.mxu0 %v67
    %612 = vmatprep.subr.mxu0 %v70
    %613 = vmatpush1.msra.mxu0 %v69
    %614 = vmatprep.subr.mxu0 %v72
    %615 = vmatpush1.msra.mxu0 %v71
    %616 = vmatprep.subr.mxu0 %v74
    %617 = vmatpush1.msra.mxu0 %v73
    %618 = vmatprep.subr.mxu0 %v76
    %619 = vmatpush1.msra.mxu0 %v75
    %620 = vmatprep.subr.mxu0 %v78
    %621 = vmatpush1.msra.mxu0 %v77
    %622 = vmatprep.subr.mxu0 %v80
    %623 = vmatpush1.msra.mxu0 %v79
    %624 = vmatprep.subr.mxu0 %v82
    %625 = vmatpush1.msra.mxu0 %v81
    %626 = vmatprep.subr.mxu0 0.0
    %627 = vmatpush1.msra.mxu0 0.0
    %628 = vmatprep.subr.mxu0 0.0
    %629 = vmatpush1.msra.mxu0 0.0
    %630 = vmatprep.subr.mxu0 0.0
    %631 = vmatpush1.msra.mxu0 0.0
    %632 = vmatprep.subr.mxu0 0.0
    %633 = vmatpush1.msra.mxu0 0.0
    %634 = vmatprep.subr.mxu0 0.0
    %635 = vmatpush1.msra.mxu0 0.0
    %636 = vmatprep.subr.mxu0 0.0
    %637 = vmatpush1.msra.mxu0 0.0
    %638 = vmatprep.subr.mxu0 0.0
    %639 = vmatpush1.msra.mxu0 0.0
    %640 = vmatprep.subr.mxu0 0.0
    %641 = vmatpush1.msra.mxu0 0.0
    %642 = vmatprep.subr.mxu0 0.0
    %643 = vmatpush1.msra.mxu0 0.0
    %644 = vmatprep.subr.mxu0 0.0
    %645 = vmatpush1.msra.mxu0 0.0
    %646 = vmatprep.subr.mxu0 0.0
    %647 = vmatpush1.msra.mxu0 0.0
    %648 = vmatprep.subr.mxu0 0.0
    %649 = vmatpush1.msra.mxu0 0.0
    %650 = vmatprep.subr.mxu0 0.0
    %651 = vmatpush1.msra.mxu0 0.0
    %652 = vmatprep.subr.mxu0 0.0
    %653 = vmatpush1.msra.mxu0 0.0
    %654 = vmatprep.subr.mxu0 0.0
    %655 = vmatpush1.msra.mxu0 0.0
    %656 = vmatprep.subr.mxu0 0.0
    %657 = vmatpush1.msra.mxu0 0.0
    %658 = vmatprep.subr.mxu0 0.0
    %659 = vmatpush1.msra.mxu0 0.0
    %660 = vmatprep.subr.mxu0 0.0
    %661 = vmatpush1.msra.mxu0 0.0
    %662 = vmatprep.subr.mxu0 0.0
    %663 = vmatpush1.msra.mxu0 0.0
    %664 = vmatprep.subr.mxu0 0.0
    %665 = vmatpush1.msra.mxu0 0.0
    %666 = vmatprep.subr.mxu0 0.0
    %667 = vmatpush1.msra.mxu0 0.0
    %668 = vmatprep.subr.mxu0 0.0
    %669 = vmatpush1.msra.mxu0 0.0
    %670 = vmatprep.subr.mxu0 0.0
    %671 = vmatpush1.msra.mxu0 0.0
    %672 = vmatprep.subr.mxu0 0.0
    %673 = vmatpush1.msra.mxu0 0.0
    %674 = vmatprep.mubr.f32.mxu0 0.0
    %675 = vmatmul.mubr.f32.gmra.mrb[0].mxu0 %v608
    %v676 = vpop.f32.mrb[0].mxu0
    %v677 = vadd.f32 %v443, %v676
    %v678 = vpop.f32.mrb[0].mxu0
    %v679 = vadd.f32 %v447, %v678
    %680 = vdwg.mxu0
    %v681 = vxor.u32 %v677, 2147483648
    %v682 = vxor.u32 %v679, 2147483648
    %v683 = vmul.f32 %v681, 1.442695
    %v684 = vpow.pop %v683
    %v685 = vmul.f32 %v682, 1.442695
    %v686 = vpow.pop %v685
    %v687 = vadd.f32 %v684, 1.0
    %v688 = vadd.f32 %v686, 1.0
    %v689 = vrcp.pop %v687
    %v690 = vmul.f32 1.0, %v689
    %v691 = vrcp.pop %v688
    %v692 = vmul.f32 1.0, %v691
    %693 = vst [vmem:[#allocation2] sm:$0xff] %v690
    %694 = vst [vmem:[#allocation2 + $0x8] sm:$0xff] %v692
    // Predicated region
    $region34: #{tpu_custom_call.1} parent=1 // pred_check
      _
    $region35: #{tpu_custom_call.1} parent=1 // pred_check_branch
      %696 = sbr.rel (0) target = $region37
    $region36: #{tpu_custom_call.1} parent=1 // pred_region
      %s698 = ssub.s32 256, 256
      %699 = vsyncadd [#allocation3], %s698
      %s701 = sshll.u32 [#allocation2], 4
      %s702 = int_to_ptr.vmem [resolvable:$true] %s701
      %704 = dma.vmem_to_hbm [thread:$0]  %s702, 256, %s8, [#allocation3]
    $region37: #{tpu_custom_call.1} parent=1 // pred_fallthru
      _
    // Predicated region
    $region38: #{tpu_custom_call.1} parent=1 // pred_check
      _
    $region39: #{tpu_custom_call.1} parent=1 // pred_check_branch
      %706 = sbr.rel (0) target = $region41
    $region40: #{tpu_custom_call.1} parent=1 // pred_region
      %707 = dma.done [#allocation3], 256
    $region41: #{tpu_custom_call.1} parent=1 // pred_fallthru
      _
    %708 = vsyncpa [#allocation3], 1

</llo_original>
